<compile_context>
chip_gen: v6e
topology: v6e:2x2x1
jax: 0.10.0
libtpu: 0.0.40
codegen_flags: <defaults>
</compile_context>

<pallas_src>
import jax
import jax.numpy as jnp
from jax.experimental import pallas as pl
from jax.experimental.pallas import tpu as pltpu

HIDDEN = 128
OUT_W = 8            # packed output width: lane 0 = q1, lane 1 = q2
MISC_ROWS = 8        # packed small-parameter operand: [8, 256]
MAX_TB = 2048        # max batch tile (VMEM use stays ~MBs, far under limits)


def _round_up(x, m):
    return ((x + m - 1) // m) * m


def _pick_tile(B):
    """Power-of-two bucketed batch tile.

    - bounds padding waste to < TB rows,
    - limits recompiles to O(log B) distinct shapes,
    - gives >= 2 grid steps once B >= 512 so both v7x TensorCores get work.
    """
    b8 = _round_up(max(B, 1), 8)
    tb = pl.next_power_of_2(b8)
    if tb >= 512:
        tb //= 2
    return min(tb, MAX_TB)


def _critic_kernel(s_ref, a_ref, w14s_ref, w14a_ref, w25_ref, misc_ref, out_ref):
    misc = misc_ref[...]                 # [8, 256] f32 packed small params
    b14 = misc[0:1, :]                   # [1, 256]  (b1 | b4)
    b2 = misc[1:2, :HIDDEN]              # [1, 128]
    b5 = misc[1:2, HIDDEN:]              # [1, 128]
    w3r = misc[2:3, :HIDDEN]             # [1, 128]  (l3 weight as a row)
    w6r = misc[2:3, HIDDEN:]             # [1, 128]  (l6 weight as a row)
    bq = misc[3:4, :OUT_W]               # [1, 8]    (b3 -> lane 0, b6 -> lane 1)

    # Fused first layer of both heads, computed from the unpadded inputs:
    #   hg = state @ W1s|W4s + action @ W1a|W4a + b1|b4        -> [TB, 256]
    # bf16 operands, f32 accumulation.
    s_bf = s_ref[...].astype(jnp.bfloat16)
    a_bf = a_ref[...].astype(jnp.bfloat16)
    hg = (jnp.dot(s_bf, w14s_ref[...], preferred_element_type=jnp.float32)
          + jnp.dot(a_bf, w14a_ref[...], preferred_element_type=jnp.float32))
    hg = jnp.maximum(hg + b14, 0.0)

    h = hg[:, :HIDDEN].astype(jnp.bfloat16)   # Q1 branch
    g = hg[:, HIDDEN:].astype(jnp.bfloat16)   # Q2 branch

    # Second layers (two native 128-wide matmuls; w2|w5 packed along lanes).
    w2 = w25_ref[:, :HIDDEN]
    w5 = w25_ref[:, HIDDEN:]
    h = jnp.maximum(
        jnp.dot(h, w2, preferred_element_type=jnp.float32) + b2, 0.0)
    g = jnp.maximum(
        jnp.dot(g, w5, preferred_element_type=jnp.float32) + b5, 0.0)

    # Final 128 -> 1 layers as lane reductions (VPU/XLU; no padded matmul).
    q1 = jnp.sum(h * w3r, axis=-1, keepdims=True)    # [TB, 1]
    q2 = jnp.sum(g * w6r, axis=-1, keepdims=True)    # [TB, 1]

    # Pack q1 -> lane 0, q2 -> lane 1 of the narrow output tile.
    lane = jax.lax.broadcasted_iota(jnp.int32, out_ref.shape, 1)
    out_ref[...] = (jnp.where(lane == 0, q1, 0.0)
                    + jnp.where(lane == 1, q2, 0.0)
                    + bq)


def prepare_params(params, state_dim):
    """One-time repack of raw Linear params (weights stored [in, out], biases
    [out]) into TPU-friendly arrays. Call once, reuse for every forward."""
    f32, bf16 = jnp.float32, jnp.bfloat16

    # Fused first-layer weights, split by LHS operand (state rows / action rows).
    w14 = jnp.concatenate(
        [params["w1"].astype(f32), params["w4"].astype(f32)], axis=1)   # [in,256]
    w14_s = w14[:state_dim].astype(bf16)          # [state_dim, 256]
    w14_a = w14[state_dim:].astype(bf16)          # [action_dim, 256]

    # Second-layer weights packed along lanes: [128, 256] = [w2 | w5].
    w25 = jnp.concatenate(
        [params["w2"].astype(f32), params["w5"].astype(f32)], axis=1).astype(bf16)

    # All tiny params in one [8, 256] f32 operand.
    misc = jnp.zeros((MISC_ROWS, 2 * HIDDEN), f32)
    misc = misc.at[0, :HIDDEN].set(params["b1"].astype(f32))
    misc = misc.at[0, HIDDEN:].set(params["b4"].astype(f32))
    misc = misc.at[1, :HIDDEN].set(params["b2"].astype(f32))
    misc = misc.at[1, HIDDEN:].set(params["b5"].astype(f32))
    misc = misc.at[2, :HIDDEN].set(params["w3"].astype(f32).reshape(-1))
    misc = misc.at[2, HIDDEN:].set(params["w6"].astype(f32).reshape(-1))
    misc = misc.at[3, 0].set(params["b3"].astype(f32)[0])
    misc = misc.at[3, 1].set(params["b6"].astype(f32)[0])

    return dict(w14_s=w14_s, w14_a=w14_a, w25=w25, misc=misc)


@jax.jit
def critic_forward(state, action, packed):
    """Pallas equivalent of Critic.forward(state, action) -> (q1, q2)."""
    B, state_dim = state.shape
    action_dim = action.shape[1]
    in_dim = state_dim + action_dim

    TB = _pick_tile(B)
    Bp = _round_up(B, TB)

    state = state.astype(jnp.float32)
    action = action.astype(jnp.float32)
    if Bp != B:  # pad only batch rows, up to the tile multiple
        state = jnp.pad(state, ((0, Bp - B), (0, 0)))
        action = jnp.pad(action, ((0, Bp - B), (0, 0)))

    const = lambda i: (0, 0)

    flops = 2 * Bp * (in_dim * 2 * HIDDEN + 2 * HIDDEN * HIDDEN + 2 * HIDDEN)
    bytes_accessed = (Bp * in_dim * 4                      # streamed inputs (f32)
                      + Bp * OUT_W * 4                     # packed output
                      + in_dim * 2 * HIDDEN * 2            # w14_s + w14_a (bf16)
                      + HIDDEN * 2 * HIDDEN * 2            # w25 (bf16)
                      + MISC_ROWS * 2 * HIDDEN * 4)        # misc (f32)

    out = pl.pallas_call(
        _critic_kernel,
        out_shape=jax.ShapeDtypeStruct((Bp, OUT_W), jnp.float32),
        grid=(Bp // TB,),
        in_specs=[
            # Streamed, batch-tiled inputs (unpadded lane widths).
            # If xprof ever shows exposed DMA here, add pipeline_mode=pl.Buffered(3).
            pl.BlockSpec((TB, state_dim), lambda i: (i, 0)),
            pl.BlockSpec((TB, action_dim), lambda i: (i, 0)),
            # VMEM-resident weights (constant index_map).
            pl.BlockSpec((state_dim, 2 * HIDDEN), const),   # w14_s (bf16)
            pl.BlockSpec((action_dim, 2 * HIDDEN), const),  # w14_a (bf16)
            pl.BlockSpec((HIDDEN, 2 * HIDDEN), const),      # w2 | w5 (bf16)
            pl.BlockSpec((MISC_ROWS, 2 * HIDDEN), const),   # packed biases/w3/w6
        ],
        out_specs=pl.BlockSpec((TB, OUT_W), lambda i: (i, 0)),
        compiler_params=pltpu.CompilerParams(
            dimension_semantics=("parallel",)),
        cost_estimate=pl.CostEstimate(
            flops=flops, transcendentals=0, bytes_accessed=bytes_accessed),
    )(state, action, packed["w14_s"], packed["w14_a"], packed["w25"],
      packed["misc"])

    # lane 0 = q1, lane 1 = q2
    return out[:B, 0:1], out[:B, 1:2]


def init_critic_params(key, state_dim, action_dim):
    """Deterministic init matching the PyTorch Linear shapes (stored [in, out])."""
    dims = [
        ("w1", "b1", state_dim + action_dim, HIDDEN),
        ("w2", "b2", HIDDEN, HIDDEN),
        ("w3", "b3", HIDDEN, 1),
        ("w4", "b4", state_dim + action_dim, HIDDEN),
        ("w5", "b5", HIDDEN, HIDDEN),
        ("w6", "b6", HIDDEN, 1),
    ]
    params = {}
    for wname, bname, fan_in, fan_out in dims:
        key, kw, kb = jax.random.split(key, 3)
        bound = 1.0 / jnp.sqrt(jnp.float32(fan_in))
        params[wname] = jax.random.uniform(kw, (fan_in, fan_out), jnp.float32,
                                           minval=-bound, maxval=bound)
        params[bname] = jax.random.uniform(kb, (fan_out,), jnp.float32,
                                           minval=-bound, maxval=bound)
    return params


def _reference_forward(state, action, p):
    sa = jnp.concatenate([state, action], axis=1)
    h = jnp.maximum(sa @ p["w1"] + p["b1"], 0.0)
    h = jnp.maximum(h @ p["w2"] + p["b2"], 0.0)
    q1 = h @ p["w3"] + p["b3"]
    g = jnp.maximum(sa @ p["w4"] + p["b4"], 0.0)
    g = jnp.maximum(g @ p["w5"] + p["b5"], 0.0)
    q2 = g @ p["w6"] + p["b6"]
    return q1, q2


if __name__ == "__main__":
    key = jax.random.PRNGKey(0)
    k_params, k_state, k_action = jax.random.split(key, 3)

    batch, state_dim, action_dim = 8, 8, 4
    params = init_critic_params(k_params, state_dim, action_dim)
    packed = prepare_params(params, state_dim)   # one-time, outside hot path

    state = jax.random.normal(k_state, (batch, state_dim), jnp.float32)
    action = jax.random.normal(k_action, (batch, action_dim), jnp.float32)

    q1, q2 = critic_forward(state, action, packed)
    q1 = jax.block_until_ready(q1)
    q2 = jax.block_until_ready(q2)

    q1_ref, q2_ref = _reference_forward(state, action, params)
    assert q1.shape == (batch, 1) and q2.shape == (batch, 1)
    # bf16 matmul operands -> loosened tolerance vs the f32 reference.
    assert jnp.allclose(q1, q1_ref, atol=5e-2, rtol=5e-2)
    assert jnp.allclose(q2, q2_ref, atol=5e-2, rtol=5e-2)

    print("KERNEL_OK")
</pallas_src>

<mosaic_0001>
module attributes {stable_mosaic.version = 11 : i64} {
  func.func @_critic_kernel(%arg0: i32, %arg1: memref<8x8xf32, #tpu.memory_space<vmem>>, %arg2: memref<8x4xf32, #tpu.memory_space<vmem>>, %arg3: memref<8x256xbf16, #tpu.memory_space<vmem>>, %arg4: memref<4x256xbf16, #tpu.memory_space<vmem>>, %arg5: memref<128x256xbf16, #tpu.memory_space<vmem>>, %arg6: memref<8x256xf32, #tpu.memory_space<vmem>>, %arg7: memref<8x8xf32, #tpu.memory_space<vmem>>) attributes {dimension_semantics = [#tpu.dimension_semantics<parallel>], iteration_bounds = array<i64: 1>, scalar_prefetch = 0 : i64, scratch_operands = 0 : i64, tpu.core_type = #tpu.core_type<tc>, window_params = [{transform_indices = @transform_0, window_bounds = array<i64: 8, 8>}, {transform_indices = @transform_1, window_bounds = array<i64: 8, 4>}, {pipeline_mode = #tpu.pipeline_mode<synchronous>, transform_indices = @transform_2, window_bounds = array<i64: 8, 256>}, {pipeline_mode = #tpu.pipeline_mode<synchronous>, transform_indices = @transform_3, window_bounds = array<i64: 4, 256>}, {pipeline_mode = #tpu.pipeline_mode<synchronous>, transform_indices = @transform_4, window_bounds = array<i64: 128, 256>}, {pipeline_mode = #tpu.pipeline_mode<synchronous>, transform_indices = @transform_5, window_bounds = array<i64: 8, 256>}, {transform_indices = @transform_6, window_bounds = array<i64: 8, 8>}]} {
    %c0 = arith.constant 0 : index
    %c0_0 = arith.constant 0 : index
    %0 = vector.load %arg6[%c0, %c0_0] : memref<8x256xf32, #tpu.memory_space<vmem>>, vector<8x256xf32>
    %1 = vector.extract_strided_slice %0 {offsets = [0, 0], sizes = [1, 256], strides = [1, 1]} : vector<8x256xf32> to vector<1x256xf32>
    %2 = vector.extract_strided_slice %0 {offsets = [1, 0], sizes = [1, 128], strides = [1, 1]} : vector<8x256xf32> to vector<1x128xf32>
    %3 = vector.extract_strided_slice %0 {offsets = [1, 128], sizes = [1, 128], strides = [1, 1]} : vector<8x256xf32> to vector<1x128xf32>
    %4 = vector.extract_strided_slice %0 {offsets = [2, 0], sizes = [1, 128], strides = [1, 1]} : vector<8x256xf32> to vector<1x128xf32>
    %5 = vector.extract_strided_slice %0 {offsets = [2, 128], sizes = [1, 128], strides = [1, 1]} : vector<8x256xf32> to vector<1x128xf32>
    %6 = vector.extract_strided_slice %0 {offsets = [3, 0], sizes = [1, 8], strides = [1, 1]} : vector<8x256xf32> to vector<1x8xf32>
    %c0_1 = arith.constant 0 : index
    %c0_2 = arith.constant 0 : index
    %7 = vector.load %arg1[%c0_1, %c0_2] : memref<8x8xf32, #tpu.memory_space<vmem>>, vector<8x8xf32>
    %8 = arith.truncf %7 : vector<8x8xf32> to vector<8x8xbf16>
    %c0_3 = arith.constant 0 : index
    %c0_4 = arith.constant 0 : index
    %9 = vector.load %arg2[%c0_3, %c0_4] : memref<8x4xf32, #tpu.memory_space<vmem>>, vector<8x4xf32>
    %10 = arith.truncf %9 : vector<8x4xf32> to vector<8x4xbf16>
    %c0_5 = arith.constant 0 : index
    %c0_6 = arith.constant 0 : index
    %11 = vector.load %arg3[%c0_5, %c0_6] : memref<8x256xbf16, #tpu.memory_space<vmem>>, vector<8x256xbf16>
    %cst = arith.constant dense<0.000000e+00> : vector<8x256xf32>
    %12 = tpu.matmul %8, %11, %cst {dimension_numbers = #tpu.dot_dimension_numbers<[1], [0], [0], [1], [0, 0, 1, 1], [], []>} : vector<8x8xbf16>, vector<8x256xbf16>, vector<8x256xf32> -> vector<8x256xf32>
    %c0_7 = arith.constant 0 : index
    %c0_8 = arith.constant 0 : index
    %13 = vector.load %arg4[%c0_7, %c0_8] : memref<4x256xbf16, #tpu.memory_space<vmem>>, vector<4x256xbf16>
    %cst_9 = arith.constant dense<0.000000e+00> : vector<8x256xf32>
    %14 = tpu.matmul %10, %13, %cst_9 {dimension_numbers = #tpu.dot_dimension_numbers<[1], [0], [0], [1], [0, 0, 1, 1], [], []>} : vector<8x4xbf16>, vector<4x256xbf16>, vector<8x256xf32> -> vector<8x256xf32>
    %15 = arith.addf %12, %14 : vector<8x256xf32>
    %16 = vector.broadcast %1 : vector<1x256xf32> to vector<8x256xf32>
    %17 = arith.addf %15, %16 : vector<8x256xf32>
    %cst_10 = arith.constant 0.000000e+00 : f32
    %18 = vector.broadcast %cst_10 : f32 to vector<8x256xf32>
    %19 = arith.maximumf %17, %18 : vector<8x256xf32>
    %20 = vector.extract_strided_slice %19 {offsets = [0, 0], sizes = [8, 128], strides = [1, 1]} : vector<8x256xf32> to vector<8x128xf32>
    %21 = arith.truncf %20 : vector<8x128xf32> to vector<8x128xbf16>
    %22 = vector.extract_strided_slice %19 {offsets = [0, 128], sizes = [8, 128], strides = [1, 1]} : vector<8x256xf32> to vector<8x128xf32>
    %23 = arith.truncf %22 : vector<8x128xf32> to vector<8x128xbf16>
    %c0_11 = arith.constant 0 : index
    %c0_12 = arith.constant 0 : index
    %24 = vector.load %arg5[%c0_11, %c0_12] : memref<128x256xbf16, #tpu.memory_space<vmem>>, vector<128x128xbf16>
    %c0_13 = arith.constant 0 : index
    %c128 = arith.constant 128 : index
    %25 = vector.load %arg5[%c0_13, %c128] : memref<128x256xbf16, #tpu.memory_space<vmem>>, vector<128x128xbf16>
    %cst_14 = arith.constant dense<0.000000e+00> : vector<8x128xf32>
    %26 = tpu.matmul %21, %24, %cst_14 {dimension_numbers = #tpu.dot_dimension_numbers<[1], [0], [0], [1], [0, 0, 1, 1], [], []>} : vector<8x128xbf16>, vector<128x128xbf16>, vector<8x128xf32> -> vector<8x128xf32>
    %27 = vector.broadcast %2 : vector<1x128xf32> to vector<8x128xf32>
    %28 = arith.addf %26, %27 : vector<8x128xf32>
    %cst_15 = arith.constant 0.000000e+00 : f32
    %29 = vector.broadcast %cst_15 : f32 to vector<8x128xf32>
    %30 = arith.maximumf %28, %29 : vector<8x128xf32>
    %cst_16 = arith.constant dense<0.000000e+00> : vector<8x128xf32>
    %31 = tpu.matmul %23, %25, %cst_16 {dimension_numbers = #tpu.dot_dimension_numbers<[1], [0], [0], [1], [0, 0, 1, 1], [], []>} : vector<8x128xbf16>, vector<128x128xbf16>, vector<8x128xf32> -> vector<8x128xf32>
    %32 = vector.broadcast %3 : vector<1x128xf32> to vector<8x128xf32>
    %33 = arith.addf %31, %32 : vector<8x128xf32>
    %cst_17 = arith.constant 0.000000e+00 : f32
    %34 = vector.broadcast %cst_17 : f32 to vector<8x128xf32>
    %35 = arith.maximumf %33, %34 : vector<8x128xf32>
    %36 = vector.broadcast %4 : vector<1x128xf32> to vector<8x128xf32>
    %37 = arith.mulf %30, %36 : vector<8x128xf32>
    %cst_18 = arith.constant dense<0.000000e+00> : vector<8xf32>
    %38 = vector.multi_reduction <add>, %37, %cst_18 [1] : vector<8x128xf32> to vector<8xf32>
    %39 = vector.shape_cast %38 : vector<8xf32> to vector<8x1xf32>
    %40 = vector.broadcast %5 : vector<1x128xf32> to vector<8x128xf32>
    %41 = arith.mulf %35, %40 : vector<8x128xf32>
    %cst_19 = arith.constant dense<0.000000e+00> : vector<8xf32>
    %42 = vector.multi_reduction <add>, %41, %cst_19 [1] : vector<8x128xf32> to vector<8xf32>
    %43 = vector.shape_cast %42 : vector<8xf32> to vector<8x1xf32>
    %44 = tpu.iota {dimensions = array<i32: 1>} : vector<8x8xi32>
    %c0_i32 = arith.constant 0 : i32
    %45 = vector.broadcast %c0_i32 : i32 to vector<8x8xi32>
    %46 = arith.cmpi eq, %44, %45 : vector<8x8xi32>
    %cst_20 = arith.constant 0.000000e+00 : f32
    %47 = vector.shape_cast %39 : vector<8x1xf32> to vector<8x1xf32>
    %48 = vector.broadcast %47 : vector<8x1xf32> to vector<8x8xf32>
    %49 = vector.broadcast %cst_20 : f32 to vector<8x8xf32>
    %50 = arith.select %46, %48, %49 : vector<8x8xi1>, vector<8x8xf32>
    %c1_i32 = arith.constant 1 : i32
    %51 = vector.broadcast %c1_i32 : i32 to vector<8x8xi32>
    %52 = arith.cmpi eq, %44, %51 : vector<8x8xi32>
    %cst_21 = arith.constant 0.000000e+00 : f32
    %53 = vector.shape_cast %43 : vector<8x1xf32> to vector<8x1xf32>
    %54 = vector.broadcast %53 : vector<8x1xf32> to vector<8x8xf32>
    %55 = vector.broadcast %cst_21 : f32 to vector<8x8xf32>
    %56 = arith.select %52, %54, %55 : vector<8x8xi1>, vector<8x8xf32>
    %57 = arith.addf %50, %56 : vector<8x8xf32>
    %58 = vector.broadcast %6 : vector<1x8xf32> to vector<8x8xf32>
    %59 = arith.addf %57, %58 : vector<8x8xf32>
    %c0_22 = arith.constant 0 : index
    %c0_23 = arith.constant 0 : index
    %60 = vector.load %arg7[%c0_22, %c0_23] : memref<8x8xf32, #tpu.memory_space<vmem>>, vector<8x8xf32>
    tpu.vector_store %arg7[%c0_22, %c0_23], %59 {strides = array<i32>} : memref<8x8xf32, #tpu.memory_space<vmem>>, vector<8x8xf32>,
    return
  }
  func.func @transform_0(%arg0: i32) -> (i32, i32) {
    %c0_i32 = arith.constant 0 : i32
    %c0_i32_0 = arith.constant 0 : i32
    return %arg0, %c0_i32 : i32, i32
  }
  func.func @transform_1(%arg0: i32) -> (i32, i32) {
    %c0_i32 = arith.constant 0 : i32
    %c0_i32_0 = arith.constant 0 : i32
    return %arg0, %c0_i32 : i32, i32
  }
  func.func @transform_2(%arg0: i32) -> (i32, i32) {
    %c0_i32 = arith.constant 0 : i32
    %c0_i32_0 = arith.constant 0 : i32
    %c0_i32_1 = arith.constant 0 : i32
    return %c0_i32, %c0_i32_0 : i32, i32
  }
  func.func @transform_3(%arg0: i32) -> (i32, i32) {
    %c0_i32 = arith.constant 0 : i32
    %c0_i32_0 = arith.constant 0 : i32
    %c0_i32_1 = arith.constant 0 : i32
    return %c0_i32, %c0_i32_0 : i32, i32
  }
  func.func @transform_4(%arg0: i32) -> (i32, i32) {
    %c0_i32 = arith.constant 0 : i32
    %c0_i32_0 = arith.constant 0 : i32
    %c0_i32_1 = arith.constant 0 : i32
    return %c0_i32, %c0_i32_0 : i32, i32
  }
  func.func @transform_5(%arg0: i32) -> (i32, i32) {
    %c0_i32 = arith.constant 0 : i32
    %c0_i32_0 = arith.constant 0 : i32
    %c0_i32_1 = arith.constant 0 : i32
    return %c0_i32, %c0_i32_0 : i32, i32
  }
  func.func @transform_6(%arg0: i32) -> (i32, i32) {
    %c0_i32 = arith.constant 0 : i32
    %c0_i32_0 = arith.constant 0 : i32
    return %arg0, %c0_i32 : i32, i32
  }
}

</mosaic_0001>

<llo_original>
// kernel: critic_forward.1
$region0: #{critic_forward.1}
  #allocation0 [shape = 'u32[]', space=smem, size = 0x4, offset = 0x4, fixed_abs, tag = 'smem constant byte address 0x4 - core index']
  #allocation1 [shape = 'u32[144,128]{1,0:T(1,128)}', space=vmem, size = 0x12000, scoped, tag = 'internal scratch']
  %s0 = inlined_call_operand.vmem [shape: f32[8,8], index: 0, kind: input, shape index: {}]
  %s1 = inlined_call_operand.vmem [shape: f32[8,4], index: 1, kind: input, shape index: {}]
  %s2 = inlined_call_operand.vmem [shape: bf16[8,256], index: 2, kind: input, shape index: {}]
  %s3 = inlined_call_operand.hbm [shape: bf16[4,256], index: 3, kind: input, shape index: {}]
  %s4 = inlined_call_operand.hbm [shape: bf16[128,256], index: 4, kind: input, shape index: {}]
  %s5 = inlined_call_operand.hbm [shape: f32[8,256], index: 5, kind: input, shape index: {}]
  %s6 = inlined_call_operand.vmem [shape: f32[8,8], index: 6, kind: output, shape index: {}]
  %s7 = sld [smem:[#allocation0]]
  $region46: #{critic_forward.1} parent=0
    _
  %s9 = ssub.s32 1, %s7
  %s10 = scalar_select 0, %s9, %s7
  $region1: #{critic_forward.1} parent=0
    #allocation2 [shape = 'u8[2048]{0}', space=vmem, size = 0x800, scoped, tag = 'input window, operand 3, single buffered']
    #allocation3 [shape = 's32[1]{0}', space=sflag, size = 0x4, scoped, tag = 'scoped memory for critic_forward.1']
    #allocation4 [shape = 'u8[65536]{0}', space=vmem, size = 0x10000, scoped, tag = 'input window, operand 4, single buffered']
    #allocation5 [shape = 's32[1]{0}', space=sflag, size = 0x4, scoped, tag = 'scoped memory for critic_forward.1']
    #allocation6 [shape = 'u8[8192]{0}', space=vmem, size = 0x2000, scoped, tag = 'input window, operand 5, single buffered']
    %11 = vsyncpa [#allocation3], 0
    %12 = vsyncpa [#allocation5], 0
    // Predicated region
    $region2: #{critic_forward.1} parent=1 // pred_check
      _
    $region3: #{critic_forward.1} parent=1 // pred_check_branch
      %14 = sbr.rel (0) target = $region5
    $region4: #{critic_forward.1} parent=1 // pred_region
      _
    $region5: #{critic_forward.1} parent=1 // pred_fallthru
      _
    // Predicated region
    $region6: #{critic_forward.1} parent=1 // pred_check
      _
    $region7: #{critic_forward.1} parent=1 // pred_check_branch
      %16 = sbr.rel (0) target = $region9
    $region8: #{critic_forward.1} parent=1 // pred_region
      _
    $region9: #{critic_forward.1} parent=1 // pred_fallthru
      _
    // Predicated region
    $region10: #{critic_forward.1} parent=1 // pred_check
      _
    $region11: #{critic_forward.1} parent=1 // pred_check_branch
      %18 = sbr.rel (0) target = $region13
    $region12: #{critic_forward.1} parent=1 // pred_region
      _
    $region13: #{critic_forward.1} parent=1 // pred_fallthru
      _
    // Predicated region
    $region14: #{critic_forward.1} parent=1 // pred_check
      _
    $region15: #{critic_forward.1} parent=1 // pred_check_branch
      %20 = sbr.rel (0) target = $region17
    $region16: #{critic_forward.1} parent=1 // pred_region
      %s22 = ssub.s32 64, 64
      %23 = vsyncadd [#allocation3], %s22
      %s25 = sshll.u32 [#allocation2], 4
      %s26 = int_to_ptr.vmem [resolvable:$true] %s25
      %28 = dma.hbm_to_vmem [thread:$0]  %s3, 64, %s26, [#allocation3]
    $region17: #{critic_forward.1} parent=1 // pred_fallthru
      _
    // Predicated region
    $region18: #{critic_forward.1} parent=1 // pred_check
      _
    $region19: #{critic_forward.1} parent=1 // pred_check_branch
      %30 = sbr.rel (0) target = $region21
    $region20: #{critic_forward.1} parent=1 // pred_region
      %s32 = ssub.s32 2048, 2048
      %33 = vsyncadd [#allocation5], %s32
      %s34 = sshll.u32 [#allocation4], 4
      %s35 = int_to_ptr.vmem [resolvable:$true] %s34
      %40 = dma.hbm_to_vmem [thread:$0]  %s4, 2048, %s35, [#allocation5], 128, 128, 8
    $region21: #{critic_forward.1} parent=1 // pred_fallthru
      _
    // Predicated region
    $region22: #{critic_forward.1} parent=1 // pred_check
      _
    $region23: #{critic_forward.1} parent=1 // pred_check_branch
      %42 = sbr.rel (0) target = $region25
    $region24: #{critic_forward.1} parent=1 // pred_region
      %s44 = ssub.s32 256, 256
      %45 = vsyncadd [#allocation5], %s44
      %s47 = sshll.u32 [#allocation6], 4
      %s48 = int_to_ptr.vmem [resolvable:$true] %s47
      %50 = dma.hbm_to_vmem [thread:$0]  %s5, 256, %s48, [#allocation5]
    $region25: #{critic_forward.1} parent=1 // pred_fallthru
      _
    // Predicated region
    $region26: #{critic_forward.1} parent=1 // pred_check
      _
    $region27: #{critic_forward.1} parent=1 // pred_check_branch
      %52 = sbr.rel (0) target = $region29
    $region28: #{critic_forward.1} parent=1 // pred_region
      %53 = dma.done [#allocation3], 64
    $region29: #{critic_forward.1} parent=1 // pred_fallthru
      _
    // Predicated region
    $region30: #{critic_forward.1} parent=1 // pred_check
      _
    $region31: #{critic_forward.1} parent=1 // pred_check_branch
      %55 = sbr.rel (0) target = $region33
    $region32: #{critic_forward.1} parent=1 // pred_region
      %56 = dma.done [#allocation5], 2048
    $region33: #{critic_forward.1} parent=1 // pred_fallthru
      _
    // Predicated region
    $region34: #{critic_forward.1} parent=1 // pred_check
      _
    $region35: #{critic_forward.1} parent=1 // pred_check_branch
      %58 = sbr.rel (0) target = $region37
    $region36: #{critic_forward.1} parent=1 // pred_region
      %59 = dma.done [#allocation5], 256
    $region37: #{critic_forward.1} parent=1 // pred_fallthru
      _
    %v61 = vld [vmem:[#allocation6] sm:$0xff]
    %v62 = vld [vmem:[#allocation6 + $0x8] sm:$0xff]
    %v63 = vld [vmem:[%s0] sm:$0xff]
    %v64 = vpack.c.bf16 %v63, %v63
    %v65 = vld [vmem:[%s1] sm:$0xff]
    %v66 = vpack.c.bf16 %v65, %v65
    %v67 = vld [vmem:[%s2] sm:$0xff]
    %v68 = vld [vmem:[#allocation2] sm:$0xf]
    %v71 = vunpack.c.l.s4 1983009808
    %v72 = vunpack.c.0.s8 %v71
    %v73 = vlaneseq
    %v74 = vshrl.u32 %v73, 7
    %v75 = vsub.s32 %v72, %v74
    %v76 = vrot.slane %v68, %v75
    %v77 = vcombine.high %v76, %v76
    %vm78 = vcmask 31744
    %v80 = vsel %vm78, %v66, 0
    %vm82 = vcmask 1041408
    %v84 = vsel %vm82, %v76, 0
    %v87 = vsel %vm82, %v77, 0
    %89 = vmatprep.subr.bf16.mxu0 0
    %90 = vmatpush1.bf16.msra.mxu0 0
    %91 = vmatprep.subr.bf16.mxu0 0
    %92 = vmatpush1.bf16.msra.mxu0 0
    %93 = vmatprep.subr.bf16.mxu0 0
    %94 = vmatpush1.bf16.msra.mxu0 0
    %95 = vmatprep.subr.bf16.mxu0 0
    %96 = vmatpush1.bf16.msra.mxu0 0
    %97 = vmatprep.subr.bf16.mxu0 0
    %98 = vmatpush1.bf16.msra.mxu0 0
    %99 = vmatprep.subr.bf16.mxu0 0
    %100 = vmatpush1.bf16.msra.mxu0 0
    %101 = vmatprep.subr.bf16.mxu0 0
    %102 = vmatpush1.bf16.msra.mxu0 0
    %103 = vmatprep.subr.bf16.mxu0 %v87
    %104 = vmatpush1.bf16.msra.mxu0 %v84
    %105 = vmatprep.subr.bf16.mxu0 0
    %106 = vmatpush2.bf16.msra.mxu0 0
    %107 = vmatprep.subr.bf16.mxu0 0
    %108 = vmatpush2.bf16.msra.mxu0 0
    %109 = vmatprep.subr.bf16.mxu0 0
    %110 = vmatpush2.bf16.msra.mxu0 0
    %111 = vmatprep.subr.bf16.mxu0 0
    %112 = vmatpush2.bf16.msra.mxu0 0
    %113 = vmatprep.subr.bf16.mxu0 0
    %114 = vmatpush2.bf16.msra.mxu0 0
    %115 = vmatprep.subr.bf16.mxu0 0
    %116 = vmatpush2.bf16.msra.mxu0 0
    %117 = vmatprep.subr.bf16.mxu0 0
    %118 = vmatpush2.bf16.msra.mxu0 0
    %119 = vmatprep.subr.bf16.mxu0 0
    %120 = vmatpush2.bf16.msra.mxu0 0
    %121 = vmatprep.mubr.bf16.mxu0 0
    %122 = vmatmul.mubr.bf16.gmra.mxu0 %v80
    %v123 = vpop.f32.mrf.mxu0
    %v124 = vadd.f32 0.0, %v123
    %v125 = vpop.f32.mrf.mxu0
    %v126 = vadd.f32 0.0, %v125
    %v127 = vpop.f32.mrf.mxu0
    %v128 = vpop.f32.mrf.mxu0
    %129 = vdwg.mxu0
    %v131 = vunpack.c.l.b16 %v67
    %v132 = vunpack.c.h.b16 %v67
    %v133 = vpack.c.b16 %v131, %v131
    %v134 = vpack.c.b16 %v132, %v132
    %vm135 = vcmask 64512
    %v137 = vsel %vm135, %v64, 0
    %vm139 = vcmask 1043456
    %v141 = vsel %vm139, %v133, 0
    %v144 = vsel %vm139, %v134, 0
    %146 = vmatprep.subr.bf16.mxu0 0
    %147 = vmatpush1.bf16.msra.mxu0 0
    %148 = vmatprep.subr.bf16.mxu0 0
    %149 = vmatpush1.bf16.msra.mxu0 0
    %150 = vmatprep.subr.bf16.mxu0 0
    %151 = vmatpush1.bf16.msra.mxu0 0
    %152 = vmatprep.subr.bf16.mxu0 0
    %153 = vmatpush1.bf16.msra.mxu0 0
    %154 = vmatprep.subr.bf16.mxu0 0
    %155 = vmatpush1.bf16.msra.mxu0 0
    %156 = vmatprep.subr.bf16.mxu0 0
    %157 = vmatpush1.bf16.msra.mxu0 0
    %158 = vmatprep.subr.bf16.mxu0 0
    %159 = vmatpush1.bf16.msra.mxu0 0
    %160 = vmatprep.subr.bf16.mxu0 %v144
    %161 = vmatpush1.bf16.msra.mxu0 %v141
    %162 = vmatprep.subr.bf16.mxu0 0
    %163 = vmatpush2.bf16.msra.mxu0 0
    %164 = vmatprep.subr.bf16.mxu0 0
    %165 = vmatpush2.bf16.msra.mxu0 0
    %166 = vmatprep.subr.bf16.mxu0 0
    %167 = vmatpush2.bf16.msra.mxu0 0
    %168 = vmatprep.subr.bf16.mxu0 0
    %169 = vmatpush2.bf16.msra.mxu0 0
    %170 = vmatprep.subr.bf16.mxu0 0
    %171 = vmatpush2.bf16.msra.mxu0 0
    %172 = vmatprep.subr.bf16.mxu0 0
    %173 = vmatpush2.bf16.msra.mxu0 0
    %174 = vmatprep.subr.bf16.mxu0 0
    %175 = vmatpush2.bf16.msra.mxu0 0
    %176 = vmatprep.subr.bf16.mxu0 0
    %177 = vmatpush2.bf16.msra.mxu0 0
    %178 = vmatprep.mubr.bf16.mxu0 0
    %179 = vmatmul.mubr.bf16.gmra.mxu0 %v137
    %v180 = vpop.f32.mrf.mxu0
    %v181 = vadd.f32 %v124, %v180
    %v182 = vpop.f32.mrf.mxu0
    %v183 = vadd.f32 %v126, %v182
    %v184 = vpop.f32.mrf.mxu0
    %v185 = vpop.f32.mrf.mxu0
    %186 = vdwg.mxu0
    %v187 = vlaneseq
    %v188 = vshrl.u32 %v187, 7
    %v189 = vsub.s32 0, %v188
    %v190 = vrot.slane %v61, %v189
    %v191 = vlaneseq
    %v192 = vshrl.u32 %v191, 7
    %v193 = vsub.s32 0, %v192
    %v194 = vrot.slane %v62, %v193
    %v195 = vadd.f32 %v181, %v190
    %v196 = vadd.f32 %v183, %v194
    %v197 = vmax.f32 %v195, 0.0
    %v198 = vmax.f32 %v196, 0.0
    %v199 = vpack.c.bf16 %v197, %v197
    %v200 = vpack.c.bf16 %v198, %v198
    %v201 = vld [vmem:[#allocation4] sm:$0xf]
    %v202 = vld [vmem:[#allocation4 + $0x8] sm:$0xf]
    %v203 = vld [vmem:[#allocation4 + $0x10] sm:$0xf]
    %v204 = vld [vmem:[#allocation4 + $0x18] sm:$0xf]
    %v205 = vld [vmem:[#allocation4 + $0x20] sm:$0xf]
    %v206 = vld [vmem:[#allocation4 + $0x28] sm:$0xf]
    %v207 = vld [vmem:[#allocation4 + $0x30] sm:$0xf]
    %v208 = vld [vmem:[#allocation4 + $0x38] sm:$0xf]
    %v209 = vld [vmem:[#allocation4 + $0x40] sm:$0xf]
    %v210 = vld [vmem:[#allocation4 + $0x48] sm:$0xf]
    %v211 = vld [vmem:[#allocation4 + $0x50] sm:$0xf]
    %v212 = vld [vmem:[#allocation4 + $0x58] sm:$0xf]
    %v213 = vld [vmem:[#allocation4 + $0x60] sm:$0xf]
    %v214 = vld [vmem:[#allocation4 + $0x68] sm:$0xf]
    %v215 = vld [vmem:[#allocation4 + $0x70] sm:$0xf]
    %v216 = vld [vmem:[#allocation4 + $0x78] sm:$0xf]
    %v217 = vld [vmem:[#allocation4 + $0x4] sm:$0xf]
    %v218 = vld [vmem:[#allocation4 + $0xc] sm:$0xf]
    %v219 = vld [vmem:[#allocation4 + $0x14] sm:$0xf]
    %v220 = vld [vmem:[#allocation4 + $0x1c] sm:$0xf]
    %v221 = vld [vmem:[#allocation4 + $0x24] sm:$0xf]
    %v222 = vld [vmem:[#allocation4 + $0x2c] sm:$0xf]
    %v223 = vld [vmem:[#allocation4 + $0x34] sm:$0xf]
    %v224 = vld [vmem:[#allocation4 + $0x3c] sm:$0xf]
    %v225 = vld [vmem:[#allocation4 + $0x44] sm:$0xf]
    %v226 = vld [vmem:[#allocation4 + $0x4c] sm:$0xf]
    %v227 = vld [vmem:[#allocation4 + $0x54] sm:$0xf]
    %v228 = vld [vmem:[#allocation4 + $0x5c] sm:$0xf]
    %v229 = vld [vmem:[#allocation4 + $0x64] sm:$0xf]
    %v230 = vld [vmem:[#allocation4 + $0x6c] sm:$0xf]
    %v231 = vld [vmem:[#allocation4 + $0x74] sm:$0xf]
    %v232 = vld [vmem:[#allocation4 + $0x7c] sm:$0xf]
    %v233 = vlaneseq
    %v234 = vshrl.u32 %v233, 7
    %v235 = vsub.s32 1, %v234
    %v236 = vrot.slane %v61, %v235
    %v253 = vunpack.c.l.b16 %v201
    %v254 = vunpack.c.l.b16 %v202
    %v255 = vunpack.c.l.b16 %v203
    %v256 = vunpack.c.l.b16 %v204
    %v257 = vunpack.c.l.b16 %v205
    %v258 = vunpack.c.l.b16 %v206
    %v259 = vunpack.c.l.b16 %v207
    %v260 = vunpack.c.l.b16 %v208
    %v261 = vunpack.c.l.b16 %v209
    %v262 = vunpack.c.l.b16 %v210
    %v263 = vunpack.c.l.b16 %v211
    %v264 = vunpack.c.l.b16 %v212
    %v265 = vunpack.c.l.b16 %v213
    %v266 = vunpack.c.l.b16 %v214
    %v267 = vunpack.c.l.b16 %v215
    %v268 = vunpack.c.l.b16 %v216
    %v269 = vpack.c.b16 %v254, %v253
    %v270 = vpack.c.b16 %v256, %v255
    %v271 = vpack.c.b16 %v258, %v257
    %v272 = vpack.c.b16 %v260, %v259
    %v273 = vpack.c.b16 %v262, %v261
    %v274 = vpack.c.b16 %v264, %v263
    %v275 = vpack.c.b16 %v266, %v265
    %v276 = vpack.c.b16 %v268, %v267
    %285 = vmatprep.subr.bf16.mxu0 0
    %286 = vmatpush1.bf16.msra.mxu0 %v276
    %287 = vmatprep.subr.bf16.mxu0 0
    %288 = vmatpush1.bf16.msra.mxu0 %v275
    %289 = vmatprep.subr.bf16.mxu0 0
    %290 = vmatpush1.bf16.msra.mxu0 %v274
    %291 = vmatprep.subr.bf16.mxu0 0
    %292 = vmatpush1.bf16.msra.mxu0 %v273
    %293 = vmatprep.subr.bf16.mxu0 0
    %294 = vmatpush1.bf16.msra.mxu0 %v272
    %295 = vmatprep.subr.bf16.mxu0 0
    %296 = vmatpush1.bf16.msra.mxu0 %v271
    %297 = vmatprep.subr.bf16.mxu0 0
    %298 = vmatpush1.bf16.msra.mxu0 %v270
    %299 = vmatprep.subr.bf16.mxu0 0
    %300 = vmatpush1.bf16.msra.mxu0 %v269
    %301 = vmatprep.subr.bf16.mxu0 0
    %302 = vmatpush2.bf16.msra.mxu0 0
    %303 = vmatprep.subr.bf16.mxu0 0
    %304 = vmatpush2.bf16.msra.mxu0 0
    %305 = vmatprep.subr.bf16.mxu0 0
    %306 = vmatpush2.bf16.msra.mxu0 0
    %307 = vmatprep.subr.bf16.mxu0 0
    %308 = vmatpush2.bf16.msra.mxu0 0
    %309 = vmatprep.subr.bf16.mxu0 0
    %310 = vmatpush2.bf16.msra.mxu0 0
    %311 = vmatprep.subr.bf16.mxu0 0
    %312 = vmatpush2.bf16.msra.mxu0 0
    %313 = vmatprep.subr.bf16.mxu0 0
    %314 = vmatpush2.bf16.msra.mxu0 0
    %315 = vmatprep.subr.bf16.mxu0 0
    %316 = vmatpush2.bf16.msra.mxu0 0
    %317 = vmatprep.mubr.bf16.mxu0 0
    %318 = vmatmul.mubr.bf16.gmra.mxu0 %v199
    %v319 = vpop.f32.mrf.mxu0
    %v320 = vadd.f32 %v236, %v319
    %v321 = vpop.f32.mrf.mxu0
    %v322 = vpop.f32.mrf.mxu0
    %v323 = vpop.f32.mrf.mxu0
    %324 = vdwg.mxu0
    %v325 = vmax.f32 %v320, 0.0
    %v326 = vlaneseq
    %v327 = vshrl.u32 %v326, 7
    %v328 = vsub.s32 1, %v327
    %v329 = vrot.slane %v62, %v328
    %v346 = vunpack.c.l.b16 %v217
    %v347 = vunpack.c.l.b16 %v218
    %v348 = vunpack.c.l.b16 %v219
    %v349 = vunpack.c.l.b16 %v220
    %v350 = vunpack.c.l.b16 %v221
    %v351 = vunpack.c.l.b16 %v222
    %v352 = vunpack.c.l.b16 %v223
    %v353 = vunpack.c.l.b16 %v224
    %v354 = vunpack.c.l.b16 %v225
    %v355 = vunpack.c.l.b16 %v226
    %v356 = vunpack.c.l.b16 %v227
    %v357 = vunpack.c.l.b16 %v228
    %v358 = vunpack.c.l.b16 %v229
    %v359 = vunpack.c.l.b16 %v230
    %v360 = vunpack.c.l.b16 %v231
    %v361 = vunpack.c.l.b16 %v232
    %v362 = vpack.c.b16 %v347, %v346
    %v363 = vpack.c.b16 %v349, %v348
    %v364 = vpack.c.b16 %v351, %v350
    %v365 = vpack.c.b16 %v353, %v352
    %v366 = vpack.c.b16 %v355, %v354
    %v367 = vpack.c.b16 %v357, %v356
    %v368 = vpack.c.b16 %v359, %v358
    %v369 = vpack.c.b16 %v361, %v360
    %378 = vmatprep.subr.bf16.mxu0 0
    %379 = vmatpush1.bf16.msra.mxu0 %v369
    %380 = vmatprep.subr.bf16.mxu0 0
    %381 = vmatpush1.bf16.msra.mxu0 %v368
    %382 = vmatprep.subr.bf16.mxu0 0
    %383 = vmatpush1.bf16.msra.mxu0 %v367
    %384 = vmatprep.subr.bf16.mxu0 0
    %385 = vmatpush1.bf16.msra.mxu0 %v366
    %386 = vmatprep.subr.bf16.mxu0 0
    %387 = vmatpush1.bf16.msra.mxu0 %v365
    %388 = vmatprep.subr.bf16.mxu0 0
    %389 = vmatpush1.bf16.msra.mxu0 %v364
    %390 = vmatprep.subr.bf16.mxu0 0
    %391 = vmatpush1.bf16.msra.mxu0 %v363
    %392 = vmatprep.subr.bf16.mxu0 0
    %393 = vmatpush1.bf16.msra.mxu0 %v362
    %394 = vmatprep.subr.bf16.mxu0 0
    %395 = vmatpush2.bf16.msra.mxu0 0
    %396 = vmatprep.subr.bf16.mxu0 0
    %397 = vmatpush2.bf16.msra.mxu0 0
    %398 = vmatprep.subr.bf16.mxu0 0
    %399 = vmatpush2.bf16.msra.mxu0 0
    %400 = vmatprep.subr.bf16.mxu0 0
    %401 = vmatpush2.bf16.msra.mxu0 0
    %402 = vmatprep.subr.bf16.mxu0 0
    %403 = vmatpush2.bf16.msra.mxu0 0
    %404 = vmatprep.subr.bf16.mxu0 0
    %405 = vmatpush2.bf16.msra.mxu0 0
    %406 = vmatprep.subr.bf16.mxu0 0
    %407 = vmatpush2.bf16.msra.mxu0 0
    %408 = vmatprep.subr.bf16.mxu0 0
    %409 = vmatpush2.bf16.msra.mxu0 0
    %410 = vmatprep.mubr.bf16.mxu0 0
    %411 = vmatmul.mubr.bf16.gmra.mxu0 %v200
    %v412 = vpop.f32.mrf.mxu0
    %v413 = vadd.f32 %v329, %v412
    %v414 = vpop.f32.mrf.mxu0
    %v415 = vpop.f32.mrf.mxu0
    %v416 = vpop.f32.mrf.mxu0
    %417 = vdwg.mxu0
    %v418 = vmax.f32 %v413, 0.0
    %v419 = vlaneseq
    %v420 = vshrl.u32 %v419, 7
    %v421 = vsub.s32 2, %v420
    %v422 = vrot.slane %v61, %v421
    %v423 = vmul.f32 %v325, %v422
    %424 = vadd.xlane.f32.xlu0 %v423
    %v425 = vpop.xlane.xlu0 %424
    %v426 = vlaneseq
    %v427 = vshrl.u32 %v426, 7
    %v428 = vsub.s32 2, %v427
    %v429 = vrot.slane %v62, %v428
    %v430 = vmul.f32 %v418, %v429
    %431 = vadd.xlane.f32.xlu0 %v430
    %v432 = vpop.xlane.xlu0 %431
    %v433 = vlaneseq
    %v434 = vand.u32 %v433, 127
    %vm435 = vcmp.eq.s32.totalorder %v434, 0
    %v436 = vsel %vm435, %v425, 0.0
    %vm437 = vcmp.eq.s32.totalorder %v434, 1
    %v438 = vsel %vm437, %v432, 0.0
    %v439 = vadd.f32 %v436, %v438
    %v440 = vlaneseq
    %v441 = vshrl.u32 %v440, 7
    %v442 = vsub.s32 3, %v441
    %v443 = vrot.slane %v61, %v442
    %v444 = vadd.f32 %v439, %v443
    %445 = vst.msk [vmem:[%s6] sm:$0xff] %vm135, %v444
    // Predicated region
    $region38: #{critic_forward.1} parent=1 // pred_check
      _
    $region39: #{critic_forward.1} parent=1 // pred_check_branch
      %447 = sbr.rel (0) target = $region41
    $region40: #{critic_forward.1} parent=1 // pred_region
      _
    $region41: #{critic_forward.1} parent=1 // pred_fallthru
      _
    // Predicated region
    $region42: #{critic_forward.1} parent=1 // pred_check
      _
    $region43: #{critic_forward.1} parent=1 // pred_check_branch
      %449 = sbr.rel (0) target = $region45
    $region44: #{critic_forward.1} parent=1 // pred_region
      _
    $region45: #{critic_forward.1} parent=1 // pred_fallthru
      _
    %450 = vsyncpa [#allocation3], 1
    %451 = vsyncpa [#allocation5], 1

</llo_original>
